<compile_context>
chip_gen: v7x
topology: tpu7x:2x2x1
jax: 0.10.0
libtpu: 0.0.40
codegen_flags: <defaults>
</compile_context>

<pallas_src>
import functools

import jax
import jax.numpy as jnp
from jax.experimental import pallas as pl
from jax.experimental.pallas import tpu as pltpu


def _round_up(x, m):
    return ((x + m - 1) // m) * m


def _cdiv(a, b):
    return (a + b - 1) // b


def _accumulate_lanes(acc, tile, ts):
    # Lane-dense accumulation: (TB, 128) VALU adds over 128-wide, lane-aligned
    # column slices instead of a per-step cross-lane (XLU) reduction.
    for c in range(0, ts, 128):
        acc = acc + tile[:, c:c + 128]
    return acc


def _mse_masked_kernel(seq_ref, yp_ref, yt_ref, o_ref, acc_ref, *, s_true, ts):
    k = pl.program_id(1)

    @pl.when(k == 0)
    def _():
        acc_ref[...] = jnp.zeros_like(acc_ref)

    yp = yp_ref[...].astype(jnp.float32)          # (TB, TS)
    yt = yt_ref[...].astype(jnp.float32)          # (TB, TS)
    d = yp - yt
    sq = d * d

    tb = yp.shape[0]
    # Clamp to S so ragged-edge columns (col >= S -> garbage data) never pass,
    # and fold the tile offset into the narrow (TB, 1) side instead of adding
    # k*TS to the full-tile iota.
    rem = jnp.minimum(seq_ref[...], s_true) - k * ts          # (TB, 1) int32
    col = jax.lax.broadcasted_iota(jnp.int32, (tb, ts), 1)    # (TB, TS) local iota
    contrib = jnp.where(col < rem, sq, 0.0)                   # select: NaNs can't leak

    acc_ref[...] = _accumulate_lanes(acc_ref[...], contrib, ts)

    @pl.when(k == pl.num_programs(1) - 1)
    def _():
        # den == sum_j mask == min(seq_len, S); no per-tile mask reduction needed.
        # seq_len == 0 keeps PyTorch's 0/0 -> NaN semantics for that row.
        den = jnp.minimum(seq_ref[...], s_true).astype(jnp.float32)
        o_ref[...] = jnp.sum(acc_ref[...], axis=1, keepdims=True) / den


def _mse_full_kernel(yp_ref, yt_ref, o_ref, acc_ref, *, s_true, ts):
    # Unmasked fast path: no iota / compare / select and no seq input.  Only
    # dispatched when S % TS == 0, so there are no ragged-edge columns.
    k = pl.program_id(1)

    @pl.when(k == 0)
    def _():
        acc_ref[...] = jnp.zeros_like(acc_ref)

    yp = yp_ref[...].astype(jnp.float32)
    yt = yt_ref[...].astype(jnp.float32)
    d = yp - yt
    acc_ref[...] = _accumulate_lanes(acc_ref[...], d * d, ts)

    @pl.when(k == pl.num_programs(1) - 1)
    def _():
        o_ref[...] = jnp.sum(acc_ref[...], axis=1, keepdims=True) * (1.0 / s_true)


def mse_loss(y_pred, y_true, seq_lens=None, *, block_b=None, block_s=None):
    """Pallas-TPU MSELoss.forward. Returns a shape-(1,) float32 array."""
    B, S = y_true.shape

    # ---- tile sizes ---------------------------------------------------------
    if block_b is not None:
        TB = _round_up(int(block_b), 8)
    elif B >= 16:
        # Guarantee >= 2 blocks on the "parallel" B axis (v7x has 2 TensorCores).
        TB = min(256, _round_up(_cdiv(B, 2), 8))
    else:
        TB = _round_up(B, 8)

    itemsize = max(jnp.dtype(y_pred.dtype).itemsize, jnp.dtype(y_true.dtype).itemsize)
    if block_s is not None:
        TS = _round_up(int(block_s), 128)
    else:
        # Dtype-aware sizing: keep the double-buffered working set of the two
        # big inputs (2 inputs x 2 buffers x TB*TS*itemsize) at ~8 MiB, which
        # fits every generation's default scoped VMEM with headroom.
        budget = 8 * 1024 * 1024
        ts_cap = budget // (2 * 2 * TB * itemsize)
        ts_cap = max(128, min(8192, (ts_cap // 128) * 128))
        TS = min(ts_cap, _round_up(S, 128))

    grid = (_cdiv(B, TB), _cdiv(S, TS))

    cost = pl.CostEstimate(
        flops=3 * B * S,
        transcendentals=0,
        bytes_accessed=B * S * (jnp.dtype(y_pred.dtype).itemsize
                                + jnp.dtype(y_true.dtype).itemsize) + 8 * B,
    )
    cparams = pltpu.CompilerParams(
        dimension_semantics=("parallel", "arbitrary"),
        vmem_limit_bytes=32 * 1024 * 1024,
    )

    if seq_lens is None and S % TS == 0:
        kernel = functools.partial(_mse_full_kernel, s_true=S, ts=TS)
        per_row = pl.pallas_call(
            kernel,
            out_shape=jax.ShapeDtypeStruct((B, 1), jnp.float32),
            grid_spec=pltpu.PrefetchScalarGridSpec(
                num_scalar_prefetch=0,
                grid=grid,
                in_specs=[
                    pl.BlockSpec((TB, TS), lambda i, k: (i, k)),   # y_pred
                    pl.BlockSpec((TB, TS), lambda i, k: (i, k)),   # y_true
                ],
                out_specs=pl.BlockSpec((TB, 1), lambda i, k: (i, 0)),
                scratch_shapes=[pltpu.VMEM((TB, 128), jnp.float32)],
            ),
            compiler_params=cparams,
            cost_estimate=cost,
        )(y_pred, y_true)
    else:
        if seq_lens is None:
            seq_lens = jnp.full((B,), S, dtype=jnp.int32)
        seq2d = jnp.asarray(seq_lens).astype(jnp.int32).reshape(B, 1)
        kernel = functools.partial(_mse_masked_kernel, s_true=S, ts=TS)
        per_row = pl.pallas_call(
            kernel,
            out_shape=jax.ShapeDtypeStruct((B, 1), jnp.float32),
            grid_spec=pltpu.PrefetchScalarGridSpec(
                num_scalar_prefetch=0,
                grid=grid,
                in_specs=[
                    pl.BlockSpec((TB, 1), lambda i, k: (i, 0)),    # seq_lens
                    pl.BlockSpec((TB, TS), lambda i, k: (i, k)),   # y_pred
                    pl.BlockSpec((TB, TS), lambda i, k: (i, k)),   # y_true
                ],
                out_specs=pl.BlockSpec((TB, 1), lambda i, k: (i, 0)),
                scratch_shapes=[pltpu.VMEM((TB, 128), jnp.float32)],
            ),
            compiler_params=cparams,
            cost_estimate=cost,
        )(seq2d, y_pred, y_true)

    # Mean over the batch rows -> shape (1,), matching torch.mean(mse, dim=0).
    return jnp.mean(per_row, axis=0)


if __name__ == "__main__":
    key = jax.random.PRNGKey(0)
    k1, k2, k3, k4, k5, k6 = jax.random.split(key, 6)

    def ref_mse(yp, yt, sl):
        b, s = yt.shape
        if sl is None:
            mask = jnp.ones((b, s), jnp.float32)
        else:
            mask = (jnp.arange(s)[None, :] < sl[:, None]).astype(jnp.float32)
        num = jnp.sum((mask * (yp - yt)) ** 2, axis=1, keepdims=True)
        den = jnp.sum(mask, axis=1, keepdims=True)
        return jnp.mean(num / den, axis=0)

    # --- Small case (single tile): masked and unmasked -----------------------
    B, S = 4, 16
    yp = jax.random.normal(k1, (B, S), dtype=jnp.float32)
    yt = jax.random.normal(k2, (B, S), dtype=jnp.float32)
    sl = jnp.array([16, 10, 5, 13], dtype=jnp.int32)

    out_m = mse_loss(yp, yt, sl)
    jax.block_until_ready(out_m)
    out_f = mse_loss(yp, yt, None)
    jax.block_until_ready(out_f)
    assert jnp.allclose(out_m, ref_mse(yp, yt, sl), rtol=1e-5, atol=1e-5)
    assert jnp.allclose(out_f, ref_mse(yp, yt, None), rtol=1e-5, atol=1e-5)

    # --- Ragged shapes: multi S-tile accumulation + partial edge blocks ------
    B2, S2 = 12, 1000   # S2 not a multiple of 128, B2 not a multiple of TB
    yp2 = jax.random.normal(k3, (B2, S2), dtype=jnp.float32)
    yt2 = jax.random.normal(k4, (B2, S2), dtype=jnp.float32)
    sl2 = (jnp.arange(B2, dtype=jnp.int32) * 123 + 7) % S2 + 1
    out2 = mse_loss(yp2, yt2, sl2, block_b=8, block_s=256)
    jax.block_until_ready(out2)
    assert jnp.allclose(out2, ref_mse(yp2, yt2, sl2), rtol=1e-5, atol=1e-5)

    # --- Unmasked fast path, multiple S-tiles, bf16 on the wire --------------
    B3, S3 = 8, 1024
    yp3 = jax.random.normal(k5, (B3, S3), dtype=jnp.bfloat16)
    yt3 = jax.random.normal(k6, (B3, S3), dtype=jnp.bfloat16)
    out3 = mse_loss(yp3, yt3, None, block_s=256)
    jax.block_until_ready(out3)
    ref3 = ref_mse(yp3.astype(jnp.float32), yt3.astype(jnp.float32), None)
    assert jnp.allclose(out3, ref3, rtol=1e-4, atol=1e-4)

    print("KERNEL_OK")
</pallas_src>

<mosaic_0001>
module attributes {stable_mosaic.version = 11 : i64} {
  func.func @_mse_masked_kernel(%arg0: i32, %arg1: i32, %arg2: memref<8x1xi32, #tpu.memory_space<vmem>>, %arg3: memref<8x128xf32, #tpu.memory_space<vmem>>, %arg4: memref<8x128xf32, #tpu.memory_space<vmem>>, %arg5: memref<8x1xf32, #tpu.memory_space<vmem>>, %arg6: memref<8x128xf32, #tpu.memory_space<vmem>>) attributes {dimension_semantics = [#tpu.dimension_semantics<parallel>, #tpu.dimension_semantics<arbitrary>], iteration_bounds = array<i64: 1, 1>, scalar_prefetch = 0 : i64, scratch_operands = 1 : i64, tpu.core_type = #tpu.core_type<tc>, window_params = [{transform_indices = @transform_0, window_bounds = array<i64: 8, 1>}, {transform_indices = @transform_1, window_bounds = array<i64: 8, 128>}, {transform_indices = @transform_2, window_bounds = array<i64: 8, 128>}, {transform_indices = @transform_3, window_bounds = array<i64: 8, 1>}]} {
    %c0_i32 = arith.constant 0 : i32
    %0 = arith.cmpi eq, %arg1, %c0_i32 : i32
    %1 = arith.extui %0 : i1 to i32
    %c0_i32_0 = arith.constant 0 : i32
    %2 = arith.cmpi ne, %1, %c0_i32_0 : i32
    scf.if %2 {
      %cst_12 = arith.constant 0.000000e+00 : f32
      %24 = vector.broadcast %cst_12 : f32 to vector<8x128xf32>
      %c0_13 = arith.constant 0 : index
      %c0_14 = arith.constant 0 : index
      %25 = vector.load %arg6[%c0_13, %c0_14] : memref<8x128xf32, #tpu.memory_space<vmem>>, vector<8x128xf32>
      tpu.vector_store %arg6[%c0_13, %c0_14], %24 {strides = array<i32>} : memref<8x128xf32, #tpu.memory_space<vmem>>, vector<8x128xf32>,
    } else {
    }
    %c0 = arith.constant 0 : index
    %c0_1 = arith.constant 0 : index
    %3 = vector.load %arg3[%c0, %c0_1] : memref<8x128xf32, #tpu.memory_space<vmem>>, vector<8x128xf32>
    %c0_2 = arith.constant 0 : index
    %c0_3 = arith.constant 0 : index
    %4 = vector.load %arg4[%c0_2, %c0_3] : memref<8x128xf32, #tpu.memory_space<vmem>>, vector<8x128xf32>
    %5 = arith.subf %3, %4 : vector<8x128xf32>
    %6 = arith.mulf %5, %5 : vector<8x128xf32>
    %c0_4 = arith.constant 0 : index
    %c0_5 = arith.constant 0 : index
    %7 = vector.load %arg2[%c0_4, %c0_5] : memref<8x1xi32, #tpu.memory_space<vmem>>, vector<8x1xi32>
    %c16_i32 = arith.constant 16 : i32
    %8 = vector.broadcast %c16_i32 : i32 to vector<8x1xi32>
    %9 = arith.minsi %7, %8 : vector<8x1xi32>
    %c128_i32 = arith.constant 128 : i32
    %10 = arith.muli %arg1, %c128_i32 : i32
    %11 = vector.broadcast %10 : i32 to vector<8x1xi32>
    %12 = arith.subi %9, %11 : vector<8x1xi32>
    %13 = tpu.iota {dimensions = array<i32: 1>} : vector<8x128xi32>
    %14 = vector.broadcast %12 : vector<8x1xi32> to vector<8x128xi32>
    %15 = arith.cmpi slt, %13, %14 : vector<8x128xi32>
    %cst = arith.constant 0.000000e+00 : f32
    %16 = vector.broadcast %cst : f32 to vector<8x128xf32>
    %17 = arith.select %15, %6, %16 : vector<8x128xi1>, vector<8x128xf32>
    %c0_6 = arith.constant 0 : index
    %c0_7 = arith.constant 0 : index
    %18 = vector.load %arg6[%c0_6, %c0_7] : memref<8x128xf32, #tpu.memory_space<vmem>>, vector<8x128xf32>
    %19 = arith.addf %18, %17 : vector<8x128xf32>
    %c0_8 = arith.constant 0 : index
    %c0_9 = arith.constant 0 : index
    %20 = vector.load %arg6[%c0_8, %c0_9] : memref<8x128xf32, #tpu.memory_space<vmem>>, vector<8x128xf32>
    tpu.vector_store %arg6[%c0_8, %c0_9], %19 {strides = array<i32>} : memref<8x128xf32, #tpu.memory_space<vmem>>, vector<8x128xf32>,
    %c0_i32_10 = arith.constant 0 : i32
    %21 = arith.cmpi eq, %arg1, %c0_i32_10 : i32
    %22 = arith.extui %21 : i1 to i32
    %c0_i32_11 = arith.constant 0 : i32
    %23 = arith.cmpi ne, %22, %c0_i32_11 : i32
    scf.if %23 {
      %c0_12 = arith.constant 0 : index
      %c0_13 = arith.constant 0 : index
      %24 = vector.load %arg2[%c0_12, %c0_13] : memref<8x1xi32, #tpu.memory_space<vmem>>, vector<8x1xi32>
      %c16_i32_14 = arith.constant 16 : i32
      %25 = vector.broadcast %c16_i32_14 : i32 to vector<8x1xi32>
      %26 = arith.minsi %24, %25 : vector<8x1xi32>
      %27 = arith.sitofp %26 : vector<8x1xi32> to vector<8x1xf32>
      %c0_15 = arith.constant 0 : index
      %c0_16 = arith.constant 0 : index
      %28 = vector.load %arg6[%c0_15, %c0_16] : memref<8x128xf32, #tpu.memory_space<vmem>>, vector<8x128xf32>
      %cst_17 = arith.constant dense<0.000000e+00> : vector<8xf32>
      %29 = vector.multi_reduction <add>, %28, %cst_17 [1] : vector<8x128xf32> to vector<8xf32>
      %30 = vector.shape_cast %29 : vector<8xf32> to vector<8x1xf32>
      %31 = arith.divf %30, %27 : vector<8x1xf32>
      %c0_18 = arith.constant 0 : index
      %c0_19 = arith.constant 0 : index
      %32 = vector.load %arg5[%c0_18, %c0_19] : memref<8x1xf32, #tpu.memory_space<vmem>>, vector<8x1xf32>
      tpu.vector_store %arg5[%c0_18, %c0_19], %31 {strides = array<i32>} : memref<8x1xf32, #tpu.memory_space<vmem>>, vector<8x1xf32>,
    } else {
    }
    return
  }
  func.func @transform_0(%arg0: i32, %arg1: i32) -> (i32, i32) {
    %c0_i32 = arith.constant 0 : i32
    %c0_i32_0 = arith.constant 0 : i32
    return %arg0, %c0_i32 : i32, i32
  }
  func.func @transform_1(%arg0: i32, %arg1: i32) -> (i32, i32) {
    %c0_i32 = arith.constant 0 : i32
    return %arg0, %arg1 : i32, i32
  }
  func.func @transform_2(%arg0: i32, %arg1: i32) -> (i32, i32) {
    %c0_i32 = arith.constant 0 : i32
    return %arg0, %arg1 : i32, i32
  }
  func.func @transform_3(%arg0: i32, %arg1: i32) -> (i32, i32) {
    %c0_i32 = arith.constant 0 : i32
    %c0_i32_0 = arith.constant 0 : i32
    return %arg0, %c0_i32 : i32, i32
  }
}

</mosaic_0001>

<llo_original>
// kernel: tpu_custom_call.1
$region0: #{tpu_custom_call.1}
  #allocation0 [shape = 'u32[]', space=smem, size = 0x4, offset = 0x4, fixed_abs, tag = 'smem constant byte address 0x4 - core index']
  #allocation1 [shape = 'u32[144,128]{1,0:T(1,128)}', space=vmem, size = 0x12000, scoped, tag = 'internal scratch']
  #allocation2 [shape = 'f32[8,128]{1,0:T(8,128)}', space=vmem, size = 0x1000, scoped, tag = 'scratch operand']
  %s0 = inlined_call_operand.vmem [shape: s32[4,1], index: 0, kind: input, shape index: {}]
  %s1 = inlined_call_operand.vmem [shape: f32[4,16], index: 1, kind: input, shape index: {}]
  %s2 = inlined_call_operand.vmem [shape: f32[4,16], index: 2, kind: input, shape index: {}]
  %s3 = inlined_call_operand.vmem [shape: f32[4,1], index: 3, kind: output, shape index: {}]
  %s4 = sld [smem:[#allocation0]]
  $region60: #{tpu_custom_call.1} parent=0
    _
  %s6 = ssub.s32 1, %s4
  %s7 = scalar_select 0, %s6, %s4
  $region1: #{tpu_custom_call.1} parent=0
    #allocation3 [shape = 'u8[4096]{0}', space=vmem, size = 0x1000, scoped, tag = 'output window, operand 0, single buffered']
    // Predicated region
    $region2: #{tpu_custom_call.1} parent=1 // pred_check
      _
    $region3: #{tpu_custom_call.1} parent=1 // pred_check_branch
      %9 = sbr.rel (0) target = $region5
    $region4: #{tpu_custom_call.1} parent=1 // pred_region
      _
    $region5: #{tpu_custom_call.1} parent=1 // pred_fallthru
      _
    // Predicated region
    $region6: #{tpu_custom_call.1} parent=1 // pred_check
      _
    $region7: #{tpu_custom_call.1} parent=1 // pred_check_branch
      %11 = sbr.rel (0) target = $region9
    $region8: #{tpu_custom_call.1} parent=1 // pred_region
      _
    $region9: #{tpu_custom_call.1} parent=1 // pred_fallthru
      _
    // Predicated region
    $region10: #{tpu_custom_call.1} parent=1 // pred_check
      _
    $region11: #{tpu_custom_call.1} parent=1 // pred_check_branch
      %13 = sbr.rel (0) target = $region13
    $region12: #{tpu_custom_call.1} parent=1 // pred_region
      _
    $region13: #{tpu_custom_call.1} parent=1 // pred_fallthru
      _
    %p14 = scmp.eq.s32.totalorder 0, 0
    // Predicated region
    $region14: #{tpu_custom_call.1} parent=1 // pred_check
      %p15 = pneg %p14
    $region15: #{tpu_custom_call.1} parent=1 // pred_check_branch
      %17 = sbr.rel (%p15) target = $region17
    $region16: #{tpu_custom_call.1} parent=1 // pred_region
      %18 = vst [vmem:[#allocation2] sm:$0xff] 0.0
    $region17: #{tpu_custom_call.1} parent=1 // pred_fallthru
      _
    %v19 = vld [vmem:[%s1] sm:$0xff]
    %v20 = vld [vmem:[%s2] sm:$0xff]
    %v21 = vsub.f32 %v19, %v20
    %v22 = vmul.f32 %v21, %v21
    %v23 = vld [vmem:[%s0] sm:$0xff]
    %vm24 = vcmp.lt.s32.totalorder %v23, 16
    %v25 = vsel %vm24, %v23, 16
    %s26 = smul.u32 0, 128
    %v27 = vstv %s26
    %v28 = vsub.s32 %v25, %v27
    %v29 = vlaneseq
    %v30 = vand.u32 %v29, 127
    %31 = vset.pattern.permute.xlu0 0
    %32 = vperm.xlu0 %31, %v28
    %v33 = vpop.permute.xlu0 %32
    %vm34 = vcmp.lt.s32.totalorder %v30, %v33
    %v35 = vsel %vm34, %v22, 0.0
    %v36 = vld [vmem:[#allocation2] sm:$0xff]
    %v37 = vadd.f32 %v36, %v35
    %38 = vst [vmem:[#allocation2] sm:$0xff] %v37
    // Predicated region
    $region18: #{tpu_custom_call.1} parent=1 // pred_check
      %p39 = pneg %p14
    $region19: #{tpu_custom_call.1} parent=1 // pred_check_branch
      %41 = sbr.rel (%p39) target = $region21
    $region20: #{tpu_custom_call.1} parent=1 // pred_region
      %v42 = vld [vmem:[%s0] sm:$0xff]
      %vm43 = vcmp.lt.s32.totalorder %v42, 16
      %v44 = vsel %vm43, %v42, 16
      %v45 = vcvt.s32.f32 %v44
      %v46 = vld [vmem:[#allocation2] sm:$0xff]
      %47 = vadd.xlane.f32.xlu0 %v46
      %v48 = vpop.xlane.xlu0 %47
      %v49 = vrcp.pop %v45
      %v50 = vmul.f32 %v48, %v49
      %vm51 = vcmask 7168
      %52 = vst.msk [vmem:[#allocation3] sm:$0xff] %vm51, %v50
    $region21: #{tpu_custom_call.1} parent=1 // pred_fallthru
      _
    // Predicated region
    $region22: #{tpu_custom_call.1} parent=1 // pred_check
      _
    $region23: #{tpu_custom_call.1} parent=1 // pred_check_branch
      %54 = sbr.rel (0) target = $region25
    $region24: #{tpu_custom_call.1} parent=1 // pred_region
      // Predicated region
      $region26: #{tpu_custom_call.1} parent=24 // pred_check
        _
      $region27: #{tpu_custom_call.1} parent=24 // pred_check_branch
        %56 = sbr.rel (0) target = $region29
      $region28: #{tpu_custom_call.1} parent=24 // pred_region
        // Predicated region
        $region30: #{tpu_custom_call.1} parent=28 // pred_check
          _
        $region31: #{tpu_custom_call.1} parent=28 // pred_check_branch
          %58 = sbr.rel target = $region33
        $region32: #{tpu_custom_call.1} parent=28 // pred_region
          // Predicated region
          $region45: #{tpu_custom_call.1} parent=32 // pred_check
            _
          $region46: #{tpu_custom_call.1} parent=32 // pred_check_branch
            %73 = sbr.rel (0) target = $region48
          $region47: #{tpu_custom_call.1} parent=32 // pred_region
            loop: start=0, step=1, limit=1
            $region49: #{tpu_custom_call.1} parent=47 // loop_pre_header
              _
            $region50: #{tpu_custom_call.1} parent=47 // loop_header
              %s76 = sphi 0, %s80
              %p77 = scmp.ge.s32.totalorder %s76, 1
              %s81 = sphi [#allocation3], [#allocation3]
              %s82 = sphi %s3, %s3
            $region51: #{tpu_custom_call.1} parent=47 // loop_header_branch
              %79 = sbr.rel (%p77) target = $region55
            $region52: #{tpu_custom_call.1} parent=47 // loop_body
              %v83 = vld [vmem:[%s81] sm:$0xf]
              %84 = vst [vmem:[%s82] sm:$0xf] %v83
            $region53: #{tpu_custom_call.1} parent=47 // loop_footer
              %s80 = sadd.s32 1, %s76
            $region54: #{tpu_custom_call.1} parent=47 // loop_footer_branch
              %75 = sbr.rel target = $region50
            $region55: #{tpu_custom_call.1} parent=47 // loop_exit
              _
          $region48: #{tpu_custom_call.1} parent=32 // pred_fallthru
            _
        $region33: #{tpu_custom_call.1} parent=28 // pred_fallthru
          _
        // Predicated region
        $region34: #{tpu_custom_call.1} parent=28 // pred_check
          _
        $region35: #{tpu_custom_call.1} parent=28 // pred_check_branch
          %60 = sbr.rel (0) target = $region37
        $region36: #{tpu_custom_call.1} parent=28 // pred_region
          loop: start=0, step=1, limit=1
          $region38: #{tpu_custom_call.1} parent=36 // loop_pre_header
            _
          $region39: #{tpu_custom_call.1} parent=36 // loop_header
            %s63 = sphi 0, %s67
            %p64 = scmp.ge.s32.totalorder %s63, 1
            %s68 = sphi [#allocation3], [#allocation3]
            %s69 = sphi %s3, %s3
          $region40: #{tpu_custom_call.1} parent=36 // loop_header_branch
            %66 = sbr.rel (%p64) target = $region44
          $region41: #{tpu_custom_call.1} parent=36 // loop_body
            %v70 = vld [vmem:[%s68] sm:$0xf]
            %71 = vst [vmem:[%s69] sm:$0xf] %v70
          $region42: #{tpu_custom_call.1} parent=36 // loop_footer
            %s67 = sadd.s32 1, %s63
          $region43: #{tpu_custom_call.1} parent=36 // loop_footer_branch
            %62 = sbr.rel target = $region39
          $region44: #{tpu_custom_call.1} parent=36 // loop_exit
            _
        $region37: #{tpu_custom_call.1} parent=28 // pred_fallthru
          _
      $region29: #{tpu_custom_call.1} parent=24 // pred_fallthru
        _
      %85 = vnop
    $region25: #{tpu_custom_call.1} parent=1 // pred_fallthru
      _
    // Predicated region
    $region56: #{tpu_custom_call.1} parent=1 // pred_check
      _
    $region57: #{tpu_custom_call.1} parent=1 // pred_check_branch
      %87 = sbr.rel (0) target = $region59
    $region58: #{tpu_custom_call.1} parent=1 // pred_region
      _
    $region59: #{tpu_custom_call.1} parent=1 // pred_fallthru
      _

</llo_original>
